<compile_context>
chip_gen: v5e
topology: v5e:2x2
jax: 0.10.0
libtpu: 0.0.40
codegen_flags: <defaults>
</compile_context>

<pallas_src>
import functools

import jax
import jax.numpy as jnp
from jax.experimental import pallas as pl
from jax.experimental.pallas import tpu as pltpu

LANE = 128


def _round_up(n, m):
    return pl.cdiv(n, m) * m


def mlp_kernel(x_ref, w1_ref, b1_ref, w2_ref, b2_ref, o_ref):
    # fc1: cast the activation tile to bf16 in-kernel (cheap VPU cast; avoids
    # an extra HBM pass in the wrapper), accumulate in f32 on the MXU.
    x = x_ref[...].astype(jnp.bfloat16)
    h = jnp.dot(x, w1_ref[...], preferred_element_type=jnp.float32)
    h = jnp.maximum(h + b1_ref[...], 0.0)                 # (TB, H) + (1, H), f32
    # fc2: back to bf16 for the second MXU pass.
    out = jnp.dot(h.astype(jnp.bfloat16), w2_ref[...],
                  preferred_element_type=jnp.float32)
    o_ref[...] = (out + b2_ref[...]).astype(o_ref.dtype)  # lane-dense store


def prepare_params(w1, b1, w2, b2):
    """One-time (init-path) packing of the Linear parameters for the kernel.

    w1: (F, H), b1: (H,), w2: (H, O), b2: (O,)  — weights already transposed
    to (in, out) layout vs PyTorch's (out, in).
    Returns bf16 weights / f32 biases with H and O zero-padded to lane (128)
    multiples; zero rows/cols contribute nothing to the dot products.
    """
    F, H = w1.shape
    O = w2.shape[1]
    H_pad = _round_up(H, LANE)
    O_pad = _round_up(O, LANE)
    w1_p = jnp.zeros((F, H_pad), jnp.bfloat16).at[:, :H].set(
        w1.astype(jnp.bfloat16))
    b1_p = jnp.zeros((1, H_pad), jnp.float32).at[:, :H].set(
        b1.astype(jnp.float32))
    w2_p = jnp.zeros((H_pad, O_pad), jnp.bfloat16).at[:H, :O].set(
        w2.astype(jnp.bfloat16))
    b2_p = jnp.zeros((1, O_pad), jnp.float32).at[:, :O].set(
        b2.astype(jnp.float32))
    return w1_p, b1_p, w2_p, b2_p


def _batch_tiling(B, max_tile=1024):
    """Pick (TB, B_pad). TB is a multiple of 256 (v6e MXU M-dim, 8-sublane
    aligned); small batches run as one grid step (per-step overhead ~0.35us
    dwarfs the MXU work), large batches get ~max_tile-row tiles so the grid
    has >=2 'parallel' steps for v7x dual-TC sharding."""
    B_pad = _round_up(B, 256)
    if B_pad <= max_tile:
        return B_pad, B_pad
    n_steps = pl.cdiv(B_pad, max_tile)
    TB = _round_up(pl.cdiv(B_pad, n_steps), 256)
    return TB, _round_up(B_pad, TB)


@functools.partial(jax.jit, static_argnames=("n_out",))
def net_forward(x, w1_p, b1_p, w2_p, b2_p, *, n_out):
    """x: (B, F) f32; packed params from prepare_params(). Returns (B, n_out)
    f32 logits (no softmax, matching the PyTorch forward)."""
    B, F = x.shape
    H_pad = w1_p.shape[1]
    O_pad = w2_p.shape[1]

    TB, B_pad = _batch_tiling(B)
    if B_pad != B:
        x = jnp.pad(x, ((0, B_pad - B), (0, 0)))   # batch pad only; no F pad

    grid = (B_pad // TB,)

    flops = 2 * B_pad * (F * H_pad + H_pad * O_pad)
    bytes_accessed = (B_pad * F * jnp.dtype(x.dtype).itemsize   # x (streamed)
                      + w1_p.size * 2 + w2_p.size * 2           # bf16 weights
                      + (b1_p.size + b2_p.size) * 4             # f32 biases
                      + B_pad * O_pad * 4)                      # f32 output

    out = pl.pallas_call(
        mlp_kernel,
        out_shape=jax.ShapeDtypeStruct((B_pad, O_pad), jnp.float32),
        grid_spec=pltpu.PrefetchScalarGridSpec(
            num_scalar_prefetch=0,
            grid=grid,
            in_specs=[
                pl.BlockSpec((TB, F), lambda i: (i, 0)),         # x: tiled on B
                pl.BlockSpec((F, H_pad), lambda i: (0, 0)),      # w1: resident
                pl.BlockSpec((1, H_pad), lambda i: (0, 0)),      # b1: resident
                pl.BlockSpec((H_pad, O_pad), lambda i: (0, 0)),  # w2: resident
                pl.BlockSpec((1, O_pad), lambda i: (0, 0)),      # b2: resident
            ],
            out_specs=pl.BlockSpec((TB, O_pad), lambda i: (i, 0)),
        ),
        compiler_params=pltpu.CompilerParams(
            dimension_semantics=("parallel",)),     # batch axis: no carry
        cost_estimate=pl.CostEstimate(
            flops=flops, transcendentals=0, bytes_accessed=bytes_accessed),
    )(x, w1_p, b1_p, w2_p, b2_p)

    return out[:B, :n_out]


if __name__ == "__main__":
    # Shapes implied by the module: n_features=64 (sklearn digits 8x8 images),
    # hidden=128. "out" in the original script is len(y); use a small value.
    batch = 256
    n_features = 64
    hidden = 128
    n_out = 32

    key = jax.random.PRNGKey(0)
    kx, k1, k2, k3, k4 = jax.random.split(key, 5)

    x = jax.random.normal(kx, (batch, n_features), dtype=jnp.float32)

    # PyTorch Linear weight is (out, in); build directly in (in, out) layout.
    w1 = jax.random.normal(k1, (n_features, hidden), dtype=jnp.float32) * 0.05
    b1 = jax.random.normal(k2, (hidden,), dtype=jnp.float32) * 0.05
    w2 = jax.random.normal(k3, (hidden, n_out), dtype=jnp.float32) * 0.05
    b2 = jax.random.normal(k4, (n_out,), dtype=jnp.float32) * 0.05

    # One-time param packing (init path), then the fused forward.
    params = prepare_params(w1, b1, w2, b2)
    y = net_forward(x, *params, n_out=n_out)   # batch=256 -> single grid step
    jax.block_until_ready(y)
    assert y.shape == (batch, n_out)

    # Tight reference mirroring the kernel's bf16-operand / f32-accum math.
    ref_bf16_h = jnp.maximum(
        jnp.dot(x.astype(jnp.bfloat16), w1.astype(jnp.bfloat16),
                preferred_element_type=jnp.float32) + b1, 0.0)
    ref_bf16 = jnp.dot(ref_bf16_h.astype(jnp.bfloat16),
                       w2.astype(jnp.bfloat16),
                       preferred_element_type=jnp.float32) + b2
    assert jnp.allclose(y, ref_bf16, atol=1e-4, rtol=1e-4)

    # Loose check against the pure-f32 PyTorch-equivalent forward.
    ref_f32 = jnp.maximum(x @ w1 + b1, 0.0) @ w2 + b2
    assert jnp.allclose(y, ref_f32, atol=3e-2, rtol=3e-2)

    print("KERNEL_OK")
</pallas_src>

<mosaic_0001>
module attributes {stable_mosaic.version = 11 : i64} {
  func.func @mlp_kernel(%arg0: i32, %arg1: memref<256x64xf32, #tpu.memory_space<vmem>>, %arg2: memref<64x128xbf16, #tpu.memory_space<vmem>>, %arg3: memref<1x128xf32, #tpu.memory_space<vmem>>, %arg4: memref<128x128xbf16, #tpu.memory_space<vmem>>, %arg5: memref<1x128xf32, #tpu.memory_space<vmem>>, %arg6: memref<256x128xf32, #tpu.memory_space<vmem>>) attributes {dimension_semantics = [#tpu.dimension_semantics<parallel>], iteration_bounds = array<i64: 1>, scalar_prefetch = 0 : i64, scratch_operands = 0 : i64, tpu.core_type = #tpu.core_type<tc>, window_params = [{transform_indices = @transform_0, window_bounds = array<i64: 256, 64>}, {pipeline_mode = #tpu.pipeline_mode<synchronous>, transform_indices = @transform_1, window_bounds = array<i64: 64, 128>}, {pipeline_mode = #tpu.pipeline_mode<synchronous>, transform_indices = @transform_2, window_bounds = array<i64: 1, 128>}, {pipeline_mode = #tpu.pipeline_mode<synchronous>, transform_indices = @transform_3, window_bounds = array<i64: 128, 128>}, {pipeline_mode = #tpu.pipeline_mode<synchronous>, transform_indices = @transform_4, window_bounds = array<i64: 1, 128>}, {transform_indices = @transform_5, window_bounds = array<i64: 256, 128>}]} {
    %c0 = arith.constant 0 : index
    %c0_0 = arith.constant 0 : index
    %0 = vector.load %arg1[%c0, %c0_0] : memref<256x64xf32, #tpu.memory_space<vmem>>, vector<256x64xf32>
    %1 = arith.truncf %0 : vector<256x64xf32> to vector<256x64xbf16>
    %c0_1 = arith.constant 0 : index
    %c0_2 = arith.constant 0 : index
    %2 = vector.load %arg2[%c0_1, %c0_2] : memref<64x128xbf16, #tpu.memory_space<vmem>>, vector<64x128xbf16>
    %cst = arith.constant dense<0.000000e+00> : vector<256x128xf32>
    %3 = tpu.matmul %1, %2, %cst {dimension_numbers = #tpu.dot_dimension_numbers<[1], [0], [0], [1], [0, 0, 1, 1], [], []>} : vector<256x64xbf16>, vector<64x128xbf16>, vector<256x128xf32> -> vector<256x128xf32>
    %c0_3 = arith.constant 0 : index
    %c0_4 = arith.constant 0 : index
    %4 = vector.load %arg3[%c0_3, %c0_4] : memref<1x128xf32, #tpu.memory_space<vmem>>, vector<1x128xf32>
    %5 = vector.broadcast %4 : vector<1x128xf32> to vector<256x128xf32>
    %6 = arith.addf %3, %5 : vector<256x128xf32>
    %cst_5 = arith.constant 0.000000e+00 : f32
    %7 = vector.broadcast %cst_5 : f32 to vector<256x128xf32>
    %8 = arith.maximumf %6, %7 : vector<256x128xf32>
    %9 = arith.truncf %8 : vector<256x128xf32> to vector<256x128xbf16>
    %c0_6 = arith.constant 0 : index
    %c0_7 = arith.constant 0 : index
    %10 = vector.load %arg4[%c0_6, %c0_7] : memref<128x128xbf16, #tpu.memory_space<vmem>>, vector<128x128xbf16>
    %cst_8 = arith.constant dense<0.000000e+00> : vector<256x128xf32>
    %11 = tpu.matmul %9, %10, %cst_8 {dimension_numbers = #tpu.dot_dimension_numbers<[1], [0], [0], [1], [0, 0, 1, 1], [], []>} : vector<256x128xbf16>, vector<128x128xbf16>, vector<256x128xf32> -> vector<256x128xf32>
    %c0_9 = arith.constant 0 : index
    %c0_10 = arith.constant 0 : index
    %12 = vector.load %arg5[%c0_9, %c0_10] : memref<1x128xf32, #tpu.memory_space<vmem>>, vector<1x128xf32>
    %13 = vector.broadcast %12 : vector<1x128xf32> to vector<256x128xf32>
    %14 = arith.addf %11, %13 : vector<256x128xf32>
    %c0_11 = arith.constant 0 : index
    %c0_12 = arith.constant 0 : index
    %15 = vector.load %arg6[%c0_11, %c0_12] : memref<256x128xf32, #tpu.memory_space<vmem>>, vector<256x128xf32>
    tpu.vector_store %arg6[%c0_11, %c0_12], %14 {strides = array<i32>} : memref<256x128xf32, #tpu.memory_space<vmem>>, vector<256x128xf32>,
    return
  }
  func.func @transform_0(%arg0: i32) -> (i32, i32) {
    %c0_i32 = arith.constant 0 : i32
    %c0_i32_0 = arith.constant 0 : i32
    return %arg0, %c0_i32 : i32, i32
  }
  func.func @transform_1(%arg0: i32) -> (i32, i32) {
    %c0_i32 = arith.constant 0 : i32
    %c0_i32_0 = arith.constant 0 : i32
    %c0_i32_1 = arith.constant 0 : i32
    return %c0_i32, %c0_i32_0 : i32, i32
  }
  func.func @transform_2(%arg0: i32) -> (i32, i32) {
    %c0_i32 = arith.constant 0 : i32
    %c0_i32_0 = arith.constant 0 : i32
    %c0_i32_1 = arith.constant 0 : i32
    return %c0_i32, %c0_i32_0 : i32, i32
  }
  func.func @transform_3(%arg0: i32) -> (i32, i32) {
    %c0_i32 = arith.constant 0 : i32
    %c0_i32_0 = arith.constant 0 : i32
    %c0_i32_1 = arith.constant 0 : i32
    return %c0_i32, %c0_i32_0 : i32, i32
  }
  func.func @transform_4(%arg0: i32) -> (i32, i32) {
    %c0_i32 = arith.constant 0 : i32
    %c0_i32_0 = arith.constant 0 : i32
    %c0_i32_1 = arith.constant 0 : i32
    return %c0_i32, %c0_i32_0 : i32, i32
  }
  func.func @transform_5(%arg0: i32) -> (i32, i32) {
    %c0_i32 = arith.constant 0 : i32
    %c0_i32_0 = arith.constant 0 : i32
    return %arg0, %c0_i32 : i32, i32
  }
}

</mosaic_0001>

<llo_original>
// kernel: net_forward.1
$region0: #{net_forward.1}
  #allocation0 [shape = 'u32[]', space=smem, size = 0x4, offset = 0x4, fixed_abs, tag = 'smem constant byte address 0x4 - core index']
  #allocation1 [shape = 'u32[72,128]{1,0:T(1,128)}', space=vmem, size = 0x9000, scoped, tag = 'internal scratch']
  %s0 = inlined_call_operand.vmem [shape: f32[256,64], index: 0, kind: input, shape index: {}]
  %s1 = inlined_call_operand.vmem [shape: bf16[64,128], index: 1, kind: input, shape index: {}]
  %s2 = inlined_call_operand.vmem [shape: f32[1,128], index: 2, kind: input, shape index: {}]
  %s3 = inlined_call_operand.vmem [shape: bf16[128,128], index: 3, kind: input, shape index: {}]
  %s4 = inlined_call_operand.vmem [shape: f32[1,128], index: 4, kind: input, shape index: {}]
  %s5 = inlined_call_operand.vmem [shape: f32[256,128], index: 5, kind: output, shape index: {}]
  %s6 = sld [smem:[#allocation0]]
  $region30: #{net_forward.1} parent=0
    _
  %s8 = ssub.s32 1, %s6
  %s9 = scalar_select 0, %s8, %s6
  // Predicated region
  $region2: #{net_forward.1} parent=0 // pred_check
    _
  $region3: #{net_forward.1} parent=0 // pred_check_branch
    %11 = sbr.rel (0) target = $region5
  $region4: #{net_forward.1} parent=0 // pred_region
    _
  $region5: #{net_forward.1} parent=0 // pred_fallthru
    _
  // Predicated region
  $region6: #{net_forward.1} parent=0 // pred_check
    _
  $region7: #{net_forward.1} parent=0 // pred_check_branch
    %13 = sbr.rel (0) target = $region9
  $region8: #{net_forward.1} parent=0 // pred_region
    _
  $region9: #{net_forward.1} parent=0 // pred_fallthru
    _
  // Predicated region
  $region10: #{net_forward.1} parent=0 // pred_check
    _
  $region11: #{net_forward.1} parent=0 // pred_check_branch
    %15 = sbr.rel (0) target = $region13
  $region12: #{net_forward.1} parent=0 // pred_region
    _
  $region13: #{net_forward.1} parent=0 // pred_fallthru
    _
  // Predicated region
  $region14: #{net_forward.1} parent=0 // pred_check
    _
  $region15: #{net_forward.1} parent=0 // pred_check_branch
    %17 = sbr.rel (0) target = $region17
  $region16: #{net_forward.1} parent=0 // pred_region
    _
  $region17: #{net_forward.1} parent=0 // pred_fallthru
    _
  // Predicated region
  $region18: #{net_forward.1} parent=0 // pred_check
    _
  $region19: #{net_forward.1} parent=0 // pred_check_branch
    %19 = sbr.rel (0) target = $region21
  $region20: #{net_forward.1} parent=0 // pred_region
    _
  $region21: #{net_forward.1} parent=0 // pred_fallthru
    _
  %v21 = vld [vmem:[%s0] sm:$0xff]
  %v22 = vld [vmem:[%s0 + $0x8] sm:$0xff]
  %v23 = vld [vmem:[%s0 + $0x10] sm:$0xff]
  %v24 = vld [vmem:[%s0 + $0x18] sm:$0xff]
  %v25 = vld [vmem:[%s0 + $0x20] sm:$0xff]
  %v26 = vld [vmem:[%s0 + $0x28] sm:$0xff]
  %v27 = vld [vmem:[%s0 + $0x30] sm:$0xff]
  %v28 = vld [vmem:[%s0 + $0x38] sm:$0xff]
  %v29 = vld [vmem:[%s0 + $0x40] sm:$0xff]
  %v30 = vld [vmem:[%s0 + $0x48] sm:$0xff]
  %v31 = vld [vmem:[%s0 + $0x50] sm:$0xff]
  %v32 = vld [vmem:[%s0 + $0x58] sm:$0xff]
  %v33 = vld [vmem:[%s0 + $0x60] sm:$0xff]
  %v34 = vld [vmem:[%s0 + $0x68] sm:$0xff]
  %v35 = vld [vmem:[%s0 + $0x70] sm:$0xff]
  %v36 = vld [vmem:[%s0 + $0x78] sm:$0xff]
  %v37 = vld [vmem:[%s0 + $0x80] sm:$0xff]
  %v38 = vld [vmem:[%s0 + $0x88] sm:$0xff]
  %v39 = vld [vmem:[%s0 + $0x90] sm:$0xff]
  %v40 = vld [vmem:[%s0 + $0x98] sm:$0xff]
  %v41 = vld [vmem:[%s0 + $0xa0] sm:$0xff]
  %v42 = vld [vmem:[%s0 + $0xa8] sm:$0xff]
  %v43 = vld [vmem:[%s0 + $0xb0] sm:$0xff]
  %v44 = vld [vmem:[%s0 + $0xb8] sm:$0xff]
  %v45 = vld [vmem:[%s0 + $0xc0] sm:$0xff]
  %v46 = vld [vmem:[%s0 + $0xc8] sm:$0xff]
  %v47 = vld [vmem:[%s0 + $0xd0] sm:$0xff]
  %v48 = vld [vmem:[%s0 + $0xd8] sm:$0xff]
  %v49 = vld [vmem:[%s0 + $0xe0] sm:$0xff]
  %v50 = vld [vmem:[%s0 + $0xe8] sm:$0xff]
  %v51 = vld [vmem:[%s0 + $0xf0] sm:$0xff]
  %v52 = vld [vmem:[%s0 + $0xf8] sm:$0xff]
  %v53 = vpack.c.bf16 %v22, %v21
  %v54 = vpack.c.bf16 %v24, %v23
  %v55 = vpack.c.bf16 %v26, %v25
  %v56 = vpack.c.bf16 %v28, %v27
  %v57 = vpack.c.bf16 %v30, %v29
  %v58 = vpack.c.bf16 %v32, %v31
  %v59 = vpack.c.bf16 %v34, %v33
  %v60 = vpack.c.bf16 %v36, %v35
  %v61 = vpack.c.bf16 %v38, %v37
  %v62 = vpack.c.bf16 %v40, %v39
  %v63 = vpack.c.bf16 %v42, %v41
  %v64 = vpack.c.bf16 %v44, %v43
  %v65 = vpack.c.bf16 %v46, %v45
  %v66 = vpack.c.bf16 %v48, %v47
  %v67 = vpack.c.bf16 %v50, %v49
  %v68 = vpack.c.bf16 %v52, %v51
  %v69 = vld [vmem:[%s1] sm:$0xf]
  %v70 = vld [vmem:[%s1 + $0x4] sm:$0xf]
  %v71 = vld [vmem:[%s1 + $0x8] sm:$0xf]
  %v72 = vld [vmem:[%s1 + $0xc] sm:$0xf]
  %v73 = vld [vmem:[%s1 + $0x10] sm:$0xf]
  %v74 = vld [vmem:[%s1 + $0x14] sm:$0xf]
  %v75 = vld [vmem:[%s1 + $0x18] sm:$0xf]
  %v76 = vld [vmem:[%s1 + $0x1c] sm:$0xf]
  %v77 = vld [vmem:[%s2] sm:$0x1]
  %v79 = vperm.slane %v77, 0
  %v89 = vunpack.c.l.b16 %v69
  %v90 = vunpack.c.l.b16 %v70
  %v91 = vunpack.c.l.b16 %v71
  %v92 = vunpack.c.l.b16 %v72
  %v93 = vunpack.c.l.b16 %v73
  %v94 = vunpack.c.l.b16 %v74
  %v95 = vunpack.c.l.b16 %v75
  %v96 = vunpack.c.l.b16 %v76
  %v97 = vpack.c.b16 %v90, %v89
  %v98 = vpack.c.b16 %v92, %v91
  %v99 = vpack.c.b16 %v94, %v93
  %v100 = vpack.c.b16 %v96, %v95
  %vm105 = vcmask 523264
  %v107 = vsel %vm105, %v53, 0
  %v110 = vsel %vm105, %v54, 0
  %v113 = vsel %vm105, %v55, 0
  %v116 = vsel %vm105, %v56, 0
  %v119 = vsel %vm105, %v57, 0
  %v122 = vsel %vm105, %v58, 0
  %v125 = vsel %vm105, %v59, 0
  %v128 = vsel %vm105, %v60, 0
  %v131 = vsel %vm105, %v61, 0
  %v134 = vsel %vm105, %v62, 0
  %v137 = vsel %vm105, %v63, 0
  %v140 = vsel %vm105, %v64, 0
  %v143 = vsel %vm105, %v65, 0
  %v146 = vsel %vm105, %v66, 0
  %v149 = vsel %vm105, %v67, 0
  %v152 = vsel %vm105, %v68, 0
  %154 = vmatpush.bf16.msra.mxu0 0
  %155 = vmatpush.bf16.msra.mxu0 0
  %156 = vmatpush.bf16.msra.mxu0 0
  %157 = vmatpush.bf16.msra.mxu0 0
  %158 = vmatpush.bf16.msra.mxu0 %v100
  %159 = vmatpush.bf16.msra.mxu0 %v99
  %160 = vmatpush.bf16.msra.mxu0 %v98
  %161 = vmatpush.bf16.msra.mxu0 %v97
  %162 = vmatmul.bf16.gmra.mxu0 %v107
  %v163 = vpop.f32.mrf.mxu0
  %v164 = vadd.f32 %v79, %v163
  %v165 = vpop.f32.mrf.mxu0
  %v166 = vadd.f32 %v79, %v165
  %167 = vmatmul.bf16.gmra.mxu0 %v110
  %v168 = vpop.f32.mrf.mxu0
  %v169 = vadd.f32 %v79, %v168
  %v170 = vpop.f32.mrf.mxu0
  %v171 = vadd.f32 %v79, %v170
  %172 = vmatmul.bf16.gmra.mxu0 %v113
  %v173 = vpop.f32.mrf.mxu0
  %v174 = vadd.f32 %v79, %v173
  %v175 = vpop.f32.mrf.mxu0
  %v176 = vadd.f32 %v79, %v175
  %177 = vmatmul.bf16.gmra.mxu0 %v116
  %v178 = vpop.f32.mrf.mxu0
  %v179 = vadd.f32 %v79, %v178
  %v180 = vpop.f32.mrf.mxu0
  %v181 = vadd.f32 %v79, %v180
  %182 = vmatmul.bf16.gmra.mxu0 %v119
  %v183 = vpop.f32.mrf.mxu0
  %v184 = vadd.f32 %v79, %v183
  %v185 = vpop.f32.mrf.mxu0
  %v186 = vadd.f32 %v79, %v185
  %187 = vmatmul.bf16.gmra.mxu0 %v122
  %v188 = vpop.f32.mrf.mxu0
  %v189 = vadd.f32 %v79, %v188
  %v190 = vpop.f32.mrf.mxu0
  %v191 = vadd.f32 %v79, %v190
  %192 = vmatmul.bf16.gmra.mxu0 %v125
  %v193 = vpop.f32.mrf.mxu0
  %v194 = vadd.f32 %v79, %v193
  %v195 = vpop.f32.mrf.mxu0
  %v196 = vadd.f32 %v79, %v195
  %197 = vmatmul.bf16.gmra.mxu0 %v128
  %v198 = vpop.f32.mrf.mxu0
  %v199 = vadd.f32 %v79, %v198
  %v200 = vpop.f32.mrf.mxu0
  %v201 = vadd.f32 %v79, %v200
  %202 = vmatmul.bf16.gmra.mxu0 %v131
  %v203 = vpop.f32.mrf.mxu0
  %v204 = vadd.f32 %v79, %v203
  %v205 = vpop.f32.mrf.mxu0
  %v206 = vadd.f32 %v79, %v205
  %207 = vmatmul.bf16.gmra.mxu0 %v134
  %v208 = vpop.f32.mrf.mxu0
  %v209 = vadd.f32 %v79, %v208
  %v210 = vpop.f32.mrf.mxu0
  %v211 = vadd.f32 %v79, %v210
  %212 = vmatmul.bf16.gmra.mxu0 %v137
  %v213 = vpop.f32.mrf.mxu0
  %v214 = vadd.f32 %v79, %v213
  %v215 = vpop.f32.mrf.mxu0
  %v216 = vadd.f32 %v79, %v215
  %217 = vmatmul.bf16.gmra.mxu0 %v140
  %v218 = vpop.f32.mrf.mxu0
  %v219 = vadd.f32 %v79, %v218
  %v220 = vpop.f32.mrf.mxu0
  %v221 = vadd.f32 %v79, %v220
  %222 = vmatmul.bf16.gmra.mxu0 %v143
  %v223 = vpop.f32.mrf.mxu0
  %v224 = vadd.f32 %v79, %v223
  %v225 = vpop.f32.mrf.mxu0
  %v226 = vadd.f32 %v79, %v225
  %227 = vmatmul.bf16.gmra.mxu0 %v146
  %v228 = vpop.f32.mrf.mxu0
  %v229 = vadd.f32 %v79, %v228
  %v230 = vpop.f32.mrf.mxu0
  %v231 = vadd.f32 %v79, %v230
  %232 = vmatmul.bf16.gmra.mxu0 %v149
  %v233 = vpop.f32.mrf.mxu0
  %v234 = vadd.f32 %v79, %v233
  %v235 = vpop.f32.mrf.mxu0
  %v236 = vadd.f32 %v79, %v235
  %237 = vmatmul.bf16.gmra.mxu0 %v152
  %v238 = vpop.f32.mrf.mxu0
  %v239 = vadd.f32 %v79, %v238
  %v240 = vpop.f32.mrf.mxu0
  %v241 = vadd.f32 %v79, %v240
  %242 = vdwg.mxu0
  %v243 = vmax.f32 %v164, 0.0
  %v244 = vmax.f32 %v166, 0.0
  %v245 = vmax.f32 %v169, 0.0
  %v246 = vmax.f32 %v171, 0.0
  %v247 = vmax.f32 %v174, 0.0
  %v248 = vmax.f32 %v176, 0.0
  %v249 = vmax.f32 %v179, 0.0
  %v250 = vmax.f32 %v181, 0.0
  %v251 = vmax.f32 %v184, 0.0
  %v252 = vmax.f32 %v186, 0.0
  %v253 = vmax.f32 %v189, 0.0
  %v254 = vmax.f32 %v191, 0.0
  %v255 = vmax.f32 %v194, 0.0
  %v256 = vmax.f32 %v196, 0.0
  %v257 = vmax.f32 %v199, 0.0
  %v258 = vmax.f32 %v201, 0.0
  %v259 = vmax.f32 %v204, 0.0
  %v260 = vmax.f32 %v206, 0.0
  %v261 = vmax.f32 %v209, 0.0
  %v262 = vmax.f32 %v211, 0.0
  %v263 = vmax.f32 %v214, 0.0
  %v264 = vmax.f32 %v216, 0.0
  %v265 = vmax.f32 %v219, 0.0
  %v266 = vmax.f32 %v221, 0.0
  %v267 = vmax.f32 %v224, 0.0
  %v268 = vmax.f32 %v226, 0.0
  %v269 = vmax.f32 %v229, 0.0
  %v270 = vmax.f32 %v231, 0.0
  %v271 = vmax.f32 %v234, 0.0
  %v272 = vmax.f32 %v236, 0.0
  %v273 = vmax.f32 %v239, 0.0
  %v274 = vmax.f32 %v241, 0.0
  %v275 = vpack.c.bf16 %v244, %v243
  %v276 = vpack.c.bf16 %v246, %v245
  %v277 = vpack.c.bf16 %v248, %v247
  %v278 = vpack.c.bf16 %v250, %v249
  %v279 = vpack.c.bf16 %v252, %v251
  %v280 = vpack.c.bf16 %v254, %v253
  %v281 = vpack.c.bf16 %v256, %v255
  %v282 = vpack.c.bf16 %v258, %v257
  %v283 = vpack.c.bf16 %v260, %v259
  %v284 = vpack.c.bf16 %v262, %v261
  %v285 = vpack.c.bf16 %v264, %v263
  %v286 = vpack.c.bf16 %v266, %v265
  %v287 = vpack.c.bf16 %v268, %v267
  %v288 = vpack.c.bf16 %v270, %v269
  %v289 = vpack.c.bf16 %v272, %v271
  %v290 = vpack.c.bf16 %v274, %v273
  %v291 = vld [vmem:[%s3] sm:$0xf]
  %v292 = vld [vmem:[%s3 + $0x4] sm:$0xf]
  %v293 = vld [vmem:[%s3 + $0x8] sm:$0xf]
  %v294 = vld [vmem:[%s3 + $0xc] sm:$0xf]
  %v295 = vld [vmem:[%s3 + $0x10] sm:$0xf]
  %v296 = vld [vmem:[%s3 + $0x14] sm:$0xf]
  %v297 = vld [vmem:[%s3 + $0x18] sm:$0xf]
  %v298 = vld [vmem:[%s3 + $0x1c] sm:$0xf]
  %v299 = vld [vmem:[%s3 + $0x20] sm:$0xf]
  %v300 = vld [vmem:[%s3 + $0x24] sm:$0xf]
  %v301 = vld [vmem:[%s3 + $0x28] sm:$0xf]
  %v302 = vld [vmem:[%s3 + $0x2c] sm:$0xf]
  %v303 = vld [vmem:[%s3 + $0x30] sm:$0xf]
  %v304 = vld [vmem:[%s3 + $0x34] sm:$0xf]
  %v305 = vld [vmem:[%s3 + $0x38] sm:$0xf]
  %v306 = vld [vmem:[%s3 + $0x3c] sm:$0xf]
  %v307 = vld [vmem:[%s4] sm:$0x1]
  %v309 = vperm.slane %v307, 0
  %v327 = vunpack.c.l.b16 %v291
  %v328 = vunpack.c.l.b16 %v292
  %v329 = vunpack.c.l.b16 %v293
  %v330 = vunpack.c.l.b16 %v294
  %v331 = vunpack.c.l.b16 %v295
  %v332 = vunpack.c.l.b16 %v296
  %v333 = vunpack.c.l.b16 %v297
  %v334 = vunpack.c.l.b16 %v298
  %v335 = vunpack.c.l.b16 %v299
  %v336 = vunpack.c.l.b16 %v300
  %v337 = vunpack.c.l.b16 %v301
  %v338 = vunpack.c.l.b16 %v302
  %v339 = vunpack.c.l.b16 %v303
  %v340 = vunpack.c.l.b16 %v304
  %v341 = vunpack.c.l.b16 %v305
  %v342 = vunpack.c.l.b16 %v306
  %v343 = vpack.c.b16 %v328, %v327
  %v344 = vpack.c.b16 %v330, %v329
  %v345 = vpack.c.b16 %v332, %v331
  %v346 = vpack.c.b16 %v334, %v333
  %v347 = vpack.c.b16 %v336, %v335
  %v348 = vpack.c.b16 %v338, %v337
  %v349 = vpack.c.b16 %v340, %v339
  %v350 = vpack.c.b16 %v342, %v341
  %359 = vmatpush.bf16.msra.mxu0 %v350
  %360 = vmatpush.bf16.msra.mxu0 %v349
  %361 = vmatpush.bf16.msra.mxu0 %v348
  %362 = vmatpush.bf16.msra.mxu0 %v347
  %363 = vmatpush.bf16.msra.mxu0 %v346
  %364 = vmatpush.bf16.msra.mxu0 %v345
  %365 = vmatpush.bf16.msra.mxu0 %v344
  %366 = vmatpush.bf16.msra.mxu0 %v343
  %367 = vmatmul.bf16.gmra.mxu0 %v275
  %v368 = vpop.f32.mrf.mxu0
  %v369 = vadd.f32 %v309, %v368
  %v370 = vpop.f32.mrf.mxu0
  %v371 = vadd.f32 %v309, %v370
  %372 = vmatmul.bf16.gmra.mxu0 %v276
  %v373 = vpop.f32.mrf.mxu0
  %v374 = vadd.f32 %v309, %v373
  %v375 = vpop.f32.mrf.mxu0
  %v376 = vadd.f32 %v309, %v375
  %377 = vmatmul.bf16.gmra.mxu0 %v277
  %v378 = vpop.f32.mrf.mxu0
  %v379 = vadd.f32 %v309, %v378
  %v380 = vpop.f32.mrf.mxu0
  %v381 = vadd.f32 %v309, %v380
  %382 = vmatmul.bf16.gmra.mxu0 %v278
  %v383 = vpop.f32.mrf.mxu0
  %v384 = vadd.f32 %v309, %v383
  %v385 = vpop.f32.mrf.mxu0
  %v386 = vadd.f32 %v309, %v385
  %387 = vmatmul.bf16.gmra.mxu0 %v279
  %v388 = vpop.f32.mrf.mxu0
  %v389 = vadd.f32 %v309, %v388
  %v390 = vpop.f32.mrf.mxu0
  %v391 = vadd.f32 %v309, %v390
  %392 = vmatmul.bf16.gmra.mxu0 %v280
  %v393 = vpop.f32.mrf.mxu0
  %v394 = vadd.f32 %v309, %v393
  %v395 = vpop.f32.mrf.mxu0
  %v396 = vadd.f32 %v309, %v395
  %397 = vmatmul.bf16.gmra.mxu0 %v281
  %v398 = vpop.f32.mrf.mxu0
  %v399 = vadd.f32 %v309, %v398
  %v400 = vpop.f32.mrf.mxu0
  %v401 = vadd.f32 %v309, %v400
  %402 = vmatmul.bf16.gmra.mxu0 %v282
  %v403 = vpop.f32.mrf.mxu0
  %v404 = vadd.f32 %v309, %v403
  %v405 = vpop.f32.mrf.mxu0
  %v406 = vadd.f32 %v309, %v405
  %407 = vmatmul.bf16.gmra.mxu0 %v283
  %v408 = vpop.f32.mrf.mxu0
  %v409 = vadd.f32 %v309, %v408
  %v410 = vpop.f32.mrf.mxu0
  %v411 = vadd.f32 %v309, %v410
  %412 = vmatmul.bf16.gmra.mxu0 %v284
  %v413 = vpop.f32.mrf.mxu0
  %v414 = vadd.f32 %v309, %v413
  %v415 = vpop.f32.mrf.mxu0
  %v416 = vadd.f32 %v309, %v415
  %417 = vmatmul.bf16.gmra.mxu0 %v285
  %v418 = vpop.f32.mrf.mxu0
  %v419 = vadd.f32 %v309, %v418
  %v420 = vpop.f32.mrf.mxu0
  %v421 = vadd.f32 %v309, %v420
  %422 = vmatmul.bf16.gmra.mxu0 %v286
  %v423 = vpop.f32.mrf.mxu0
  %v424 = vadd.f32 %v309, %v423
  %v425 = vpop.f32.mrf.mxu0
  %v426 = vadd.f32 %v309, %v425
  %427 = vmatmul.bf16.gmra.mxu0 %v287
  %v428 = vpop.f32.mrf.mxu0
  %v429 = vadd.f32 %v309, %v428
  %v430 = vpop.f32.mrf.mxu0
  %v431 = vadd.f32 %v309, %v430
  %432 = vmatmul.bf16.gmra.mxu0 %v288
  %v433 = vpop.f32.mrf.mxu0
  %v434 = vadd.f32 %v309, %v433
  %v435 = vpop.f32.mrf.mxu0
  %v436 = vadd.f32 %v309, %v435
  %437 = vmatmul.bf16.gmra.mxu0 %v289
  %v438 = vpop.f32.mrf.mxu0
  %v439 = vadd.f32 %v309, %v438
  %v440 = vpop.f32.mrf.mxu0
  %v441 = vadd.f32 %v309, %v440
  %442 = vmatmul.bf16.gmra.mxu0 %v290
  %v443 = vpop.f32.mrf.mxu0
  %v444 = vadd.f32 %v309, %v443
  %v445 = vpop.f32.mrf.mxu0
  %v446 = vadd.f32 %v309, %v445
  %447 = vdwg.mxu0
  %448 = vst [vmem:[%s5] sm:$0xff] %v369
  %449 = vst [vmem:[%s5 + $0x8] sm:$0xff] %v371
  %450 = vst [vmem:[%s5 + $0x10] sm:$0xff] %v374
  %451 = vst [vmem:[%s5 + $0x18] sm:$0xff] %v376
  %452 = vst [vmem:[%s5 + $0x20] sm:$0xff] %v379
  %453 = vst [vmem:[%s5 + $0x28] sm:$0xff] %v381
  %454 = vst [vmem:[%s5 + $0x30] sm:$0xff] %v384
  %455 = vst [vmem:[%s5 + $0x38] sm:$0xff] %v386
  %456 = vst [vmem:[%s5 + $0x40] sm:$0xff] %v389
  %457 = vst [vmem:[%s5 + $0x48] sm:$0xff] %v391
  %458 = vst [vmem:[%s5 + $0x50] sm:$0xff] %v394
  %459 = vst [vmem:[%s5 + $0x58] sm:$0xff] %v396
  %460 = vst [vmem:[%s5 + $0x60] sm:$0xff] %v399
  %461 = vst [vmem:[%s5 + $0x68] sm:$0xff] %v401
  %462 = vst [vmem:[%s5 + $0x70] sm:$0xff] %v404
  %463 = vst [vmem:[%s5 + $0x78] sm:$0xff] %v406
  %464 = vst [vmem:[%s5 + $0x80] sm:$0xff] %v409
  %465 = vst [vmem:[%s5 + $0x88] sm:$0xff] %v411
  %466 = vst [vmem:[%s5 + $0x90] sm:$0xff] %v414
  %467 = vst [vmem:[%s5 + $0x98] sm:$0xff] %v416
  %468 = vst [vmem:[%s5 + $0xa0] sm:$0xff] %v419
  %469 = vst [vmem:[%s5 + $0xa8] sm:$0xff] %v421
  %470 = vst [vmem:[%s5 + $0xb0] sm:$0xff] %v424
  %471 = vst [vmem:[%s5 + $0xb8] sm:$0xff] %v426
  %472 = vst [vmem:[%s5 + $0xc0] sm:$0xff] %v429
  %473 = vst [vmem:[%s5 + $0xc8] sm:$0xff] %v431
  %474 = vst [vmem:[%s5 + $0xd0] sm:$0xff] %v434
  %475 = vst [vmem:[%s5 + $0xd8] sm:$0xff] %v436
  %476 = vst [vmem:[%s5 + $0xe0] sm:$0xff] %v439
  %477 = vst [vmem:[%s5 + $0xe8] sm:$0xff] %v441
  %478 = vst [vmem:[%s5 + $0xf0] sm:$0xff] %v444
  %479 = vst [vmem:[%s5 + $0xf8] sm:$0xff] %v446
  // Predicated region
  $region22: #{net_forward.1} parent=0 // pred_check
    _
  $region23: #{net_forward.1} parent=0 // pred_check_branch
    %481 = sbr.rel (0) target = $region25
  $region24: #{net_forward.1} parent=0 // pred_region
    _
  $region25: #{net_forward.1} parent=0 // pred_fallthru
    _
  // Predicated region
  $region26: #{net_forward.1} parent=0 // pred_check
    _
  $region27: #{net_forward.1} parent=0 // pred_check_branch
    %483 = sbr.rel (0) target = $region29
  $region28: #{net_forward.1} parent=0 // pred_region
    _
  $region29: #{net_forward.1} parent=0 // pred_fallthru
    _

</llo_original>
